<compile_context>
chip_gen: v5e
topology: v5e:2x2
jax: 0.10.0
libtpu: 0.0.40
codegen_flags: <defaults>
</compile_context>

<pallas_src>
import functools

import jax
import jax.numpy as jnp
import numpy as np
from jax.experimental import pallas as pl
from jax.experimental.pallas import tpu as pltpu


def _layer_norm_kernel(x_ref, gamma_ref, beta_ref, o_ref, *, eps, d_model):
    # (tile_rows, d_model) block; all math in f32, cast only at load/store boundary.
    n = jnp.float32(d_model)

    # Pass 1: mean.  Pass 2: centered unbiased variance (torch.std default).
    # The block is VMEM-resident, so the second read of x_ref costs no HBM traffic;
    # re-indexing (instead of reusing a bound f32 copy) keeps only `xc` live.
    mean = jnp.sum(x_ref[...].astype(jnp.float32), axis=-1, keepdims=True) / n
    xc = x_ref[...].astype(jnp.float32) - mean
    var = jnp.sum(xc * xc, axis=-1, keepdims=True) / jnp.float32(d_model - 1)

    # Per-row (tile, 1) reciprocal instead of a (tile, d_model) divide.
    inv = jnp.float32(1.0) / (jnp.sqrt(var) + jnp.float32(eps))

    gamma = gamma_ref[...].astype(jnp.float32)
    beta = beta_ref[...].astype(jnp.float32)

    # Epilogue: 4 full-tile VPU ops (sub above, mul, mul, add) — within the v7x
    # VALU budget for an HBM-bound kernel.
    o_ref[...] = (gamma * (xc * inv) + beta).astype(o_ref.dtype)


def _round_up(x, m):
    return (x + m - 1) // m * m


def _num_tensorcores_per_chip():
    # v7x (and v4/v5p megacore) have 2 TensorCores per chip; v5e/v6e have 1.
    # Only on multi-TC chips is it worth forcing multiple grid steps so that
    # dimension_semantics=("parallel",) can shard rows across cores.
    try:
        kind = jax.devices()[0].device_kind.lower()
    except Exception:
        return 1
    for tag in ("v7", "v4", "v5p"):
        if tag in kind:
            return 2
    return 1


def _choose_row_tile(rows, d_model, itemsize, num_tc, target_block_bytes=4 << 20):
    """Sublane-aligned row tile: ~4 MiB blocks; no artificial row/step caps."""
    # dtype-native sublane packing: 8 for 32-bit, 16 for 16-bit, 32 for 8-bit.
    sublane = max(8, 32 // max(1, itemsize))
    per_row = max(1, d_model * itemsize)
    tile = max(sublane, target_block_bytes // per_row)

    # Multi-TC chips: keep ~2 blocks per TensorCore so rows shard across cores
    # and each core still pipelines; do NOT force 16 steps (small-block penalty).
    if num_tc > 1 and rows > 2 * sublane:
        min_steps = 2 * num_tc
        tile = min(tile, max(sublane, rows // min_steps))

    # Never exceed the (sublane-rounded) row count.
    tile = min(tile, _round_up(rows, sublane))
    tile = max(sublane, (tile // sublane) * sublane)
    return int(tile)


def _vmem_plan(tile, d_model, itemsize, sublane):
    """Shrink tile if needed to fit a v7x-safe VMEM budget; return (tile, limit)."""

    def est(t):
        block = t * d_model * itemsize          # double-buffered in + out
        f32_block = t * d_model * 4             # f32 intermediates (xc, products)
        return 4 * block + 3 * f32_block + 4 * d_model * 4

    budget = 40 << 20
    while tile > sublane and est(tile) > budget:
        tile = max(sublane, (tile // 2) // sublane * sublane)
    vmem_limit = int(min(max(int(est(tile) * 1.25), 32 << 20), 48 << 20))
    return int(tile), vmem_limit


def layer_norm(x, gamma, beta, eps=1e-12):
    """Applies the module's LayerNorm over the last axis of x via a Pallas TPU kernel."""
    orig_shape = x.shape
    d_model = orig_shape[-1]
    if d_model < 2:
        raise ValueError("LayerNorm requires d_model >= 2 (torch.std over 1 element is undefined).")
    rows = int(np.prod(orig_shape[:-1])) if len(orig_shape) > 1 else 1

    x2 = x.reshape(rows, d_model)
    g2 = gamma.reshape(1, d_model)
    b2 = beta.reshape(1, d_model)

    itemsize = jnp.dtype(x.dtype).itemsize
    num_tc = _num_tensorcores_per_chip()
    sublane = max(8, 32 // max(1, itemsize))
    tile = _choose_row_tile(rows, d_model, itemsize, num_tc)
    tile, vmem_limit = _vmem_plan(tile, d_model, itemsize, sublane)

    # No padding: let Pallas handle the partial final block (stores are masked).
    grid = (pl.cdiv(rows, tile),)

    kernel = functools.partial(_layer_norm_kernel, eps=eps, d_model=d_model)

    out2 = pl.pallas_call(
        kernel,
        out_shape=jax.ShapeDtypeStruct((rows, d_model), x.dtype),
        grid_spec=pltpu.PrefetchScalarGridSpec(
            num_scalar_prefetch=0,
            grid=grid,
            in_specs=[
                pl.BlockSpec((tile, d_model), lambda i: (i, 0)),   # x rows
                pl.BlockSpec((1, d_model), lambda i: (0, 0)),      # gamma (broadcast)
                pl.BlockSpec((1, d_model), lambda i: (0, 0)),      # beta  (broadcast)
            ],
            out_specs=pl.BlockSpec((tile, d_model), lambda i: (i, 0)),
        ),
        compiler_params=pltpu.CompilerParams(
            dimension_semantics=("parallel",),
            vmem_limit_bytes=vmem_limit,
        ),
    )(x2, g2, b2)

    return out2.reshape(orig_shape)


def _reference_layer_norm(x, gamma, beta, eps=1e-12):
    # Pure-JAX reference matching the torch module (unbiased centered std, eps on std).
    x = x.astype(jnp.float32)
    mean = jnp.mean(x, axis=-1, keepdims=True)
    d = x.shape[-1]
    var = jnp.sum((x - mean) ** 2, axis=-1, keepdims=True) / (d - 1)
    std = jnp.sqrt(var)
    out = (x - mean) / (std + eps)
    return gamma * out + beta


if __name__ == "__main__":
    key = jax.random.PRNGKey(0)

    batch, seq, d_model = 2, 8, 32
    x = jax.random.normal(key, (batch, seq, d_model), dtype=jnp.float32)

    # Parameters initialized exactly as in the module's __init__.
    gamma = jnp.ones((d_model,), dtype=jnp.float32)
    beta = jnp.zeros((d_model,), dtype=jnp.float32)

    out = layer_norm(x, gamma, beta, eps=1e-12)
    out = jax.block_until_ready(out)

    ref = _reference_layer_norm(x, gamma, beta, eps=1e-12)
    np.testing.assert_allclose(np.asarray(out), np.asarray(ref), rtol=1e-5, atol=1e-5)

    print("KERNEL_OK")
</pallas_src>

<mosaic_0001>
module attributes {stable_mosaic.version = 11 : i64} {
  func.func @_layer_norm_kernel(%arg0: i32, %arg1: memref<16x32xf32, #tpu.memory_space<vmem>>, %arg2: memref<1x32xf32, #tpu.memory_space<vmem>>, %arg3: memref<1x32xf32, #tpu.memory_space<vmem>>, %arg4: memref<16x32xf32, #tpu.memory_space<vmem>>) attributes {dimension_semantics = [#tpu.dimension_semantics<parallel>], iteration_bounds = array<i64: 1>, scalar_prefetch = 0 : i64, scratch_operands = 0 : i64, tpu.core_type = #tpu.core_type<tc>, window_params = [{transform_indices = @transform_0, window_bounds = array<i64: 16, 32>}, {pipeline_mode = #tpu.pipeline_mode<synchronous>, transform_indices = @transform_1, window_bounds = array<i64: 1, 32>}, {pipeline_mode = #tpu.pipeline_mode<synchronous>, transform_indices = @transform_2, window_bounds = array<i64: 1, 32>}, {transform_indices = @transform_3, window_bounds = array<i64: 16, 32>}]} {
    %c0 = arith.constant 0 : index
    %c0_0 = arith.constant 0 : index
    %0 = vector.load %arg1[%c0, %c0_0] : memref<16x32xf32, #tpu.memory_space<vmem>>, vector<16x32xf32>
    %cst = arith.constant dense<0.000000e+00> : vector<16xf32>
    %1 = vector.multi_reduction <add>, %0, %cst [1] : vector<16x32xf32> to vector<16xf32>
    %2 = vector.shape_cast %1 : vector<16xf32> to vector<16x1xf32>
    %cst_1 = arith.constant 3.200000e+01 : f32
    %3 = vector.broadcast %cst_1 : f32 to vector<16x1xf32>
    %4 = arith.divf %2, %3 : vector<16x1xf32>
    %c0_2 = arith.constant 0 : index
    %c0_3 = arith.constant 0 : index
    %5 = vector.load %arg1[%c0_2, %c0_3] : memref<16x32xf32, #tpu.memory_space<vmem>>, vector<16x32xf32>
    %6 = vector.broadcast %4 : vector<16x1xf32> to vector<16x32xf32>
    %7 = arith.subf %5, %6 : vector<16x32xf32>
    %8 = arith.mulf %7, %7 : vector<16x32xf32>
    %cst_4 = arith.constant dense<0.000000e+00> : vector<16xf32>
    %9 = vector.multi_reduction <add>, %8, %cst_4 [1] : vector<16x32xf32> to vector<16xf32>
    %10 = vector.shape_cast %9 : vector<16xf32> to vector<16x1xf32>
    %cst_5 = arith.constant 3.100000e+01 : f32
    %11 = vector.broadcast %cst_5 : f32 to vector<16x1xf32>
    %12 = arith.divf %10, %11 : vector<16x1xf32>
    %13 = math.sqrt %12 : vector<16x1xf32>
    %cst_6 = arith.constant 9.99999996E-13 : f32
    %14 = vector.broadcast %cst_6 : f32 to vector<16x1xf32>
    %15 = arith.addf %13, %14 : vector<16x1xf32>
    %cst_7 = arith.constant 1.000000e+00 : f32
    %16 = vector.broadcast %cst_7 : f32 to vector<16x1xf32>
    %17 = arith.divf %16, %15 : vector<16x1xf32>
    %c0_8 = arith.constant 0 : index
    %c0_9 = arith.constant 0 : index
    %18 = vector.load %arg2[%c0_8, %c0_9] : memref<1x32xf32, #tpu.memory_space<vmem>>, vector<1x32xf32>
    %c0_10 = arith.constant 0 : index
    %c0_11 = arith.constant 0 : index
    %19 = vector.load %arg3[%c0_10, %c0_11] : memref<1x32xf32, #tpu.memory_space<vmem>>, vector<1x32xf32>
    %20 = vector.broadcast %17 : vector<16x1xf32> to vector<16x32xf32>
    %21 = arith.mulf %7, %20 : vector<16x32xf32>
    %22 = vector.broadcast %18 : vector<1x32xf32> to vector<16x32xf32>
    %23 = arith.mulf %22, %21 : vector<16x32xf32>
    %24 = vector.broadcast %19 : vector<1x32xf32> to vector<16x32xf32>
    %25 = arith.addf %23, %24 : vector<16x32xf32>
    %c0_12 = arith.constant 0 : index
    %c0_13 = arith.constant 0 : index
    %26 = vector.load %arg4[%c0_12, %c0_13] : memref<16x32xf32, #tpu.memory_space<vmem>>, vector<16x32xf32>
    tpu.vector_store %arg4[%c0_12, %c0_13], %25 {strides = array<i32>} : memref<16x32xf32, #tpu.memory_space<vmem>>, vector<16x32xf32>,
    return
  }
  func.func @transform_0(%arg0: i32) -> (i32, i32) {
    %c0_i32 = arith.constant 0 : i32
    %c0_i32_0 = arith.constant 0 : i32
    return %arg0, %c0_i32 : i32, i32
  }
  func.func @transform_1(%arg0: i32) -> (i32, i32) {
    %c0_i32 = arith.constant 0 : i32
    %c0_i32_0 = arith.constant 0 : i32
    %c0_i32_1 = arith.constant 0 : i32
    return %c0_i32, %c0_i32_0 : i32, i32
  }
  func.func @transform_2(%arg0: i32) -> (i32, i32) {
    %c0_i32 = arith.constant 0 : i32
    %c0_i32_0 = arith.constant 0 : i32
    %c0_i32_1 = arith.constant 0 : i32
    return %c0_i32, %c0_i32_0 : i32, i32
  }
  func.func @transform_3(%arg0: i32) -> (i32, i32) {
    %c0_i32 = arith.constant 0 : i32
    %c0_i32_0 = arith.constant 0 : i32
    return %arg0, %c0_i32 : i32, i32
  }
}

</mosaic_0001>

<llo_original>
// kernel: tpu_custom_call.1
$region0: #{tpu_custom_call.1}
  #allocation0 [shape = 'u32[]', space=smem, size = 0x4, offset = 0x4, fixed_abs, tag = 'smem constant byte address 0x4 - core index']
  #allocation1 [shape = 'u32[72,128]{1,0:T(1,128)}', space=vmem, size = 0x9000, scoped, tag = 'internal scratch']
  %s0 = inlined_call_operand.hbm [shape: f32[16,32], index: 0, kind: input, shape index: {}]
  %s1 = inlined_call_operand.hbm [shape: f32[1,32], index: 1, kind: input, shape index: {}]
  %s2 = inlined_call_operand.vmem [shape: f32[1,32], index: 2, kind: input, shape index: {}]
  %s3 = inlined_call_operand.hbm [shape: f32[16,32], index: 3, kind: output, shape index: {}]
  %s4 = sld [smem:[#allocation0]]
  $region30: #{tpu_custom_call.1} parent=0
    _
  %s6 = ssub.s32 1, %s4
  %s7 = scalar_select 0, %s6, %s4
  $region1: #{tpu_custom_call.1} parent=0
    #allocation2 [shape = 'u8[8192]{0}', space=vmem, size = 0x2000, scoped, tag = 'input window, operand 0, single buffered']
    #allocation3 [shape = 's32[1]{0}', space=sflag, size = 0x4, scoped, tag = 'scoped memory for tpu_custom_call.1']
    #allocation4 [shape = 's32[1]{0}', space=sflag, size = 0x4, scoped, tag = 'scoped memory for tpu_custom_call.1']
    #allocation5 [shape = 'u8[512]{0}', space=vmem, size = 0x400, scoped, tag = 'input window, operand 1, single buffered']
    #allocation6 [shape = 's32[1]{0}', space=sflag, size = 0x4, scoped, tag = 'scoped memory for tpu_custom_call.1']
    #allocation7 [shape = 'u8[8192]{0}', space=vmem, size = 0x2000, scoped, tag = 'output window, operand 0, single buffered']
    %8 = vsyncpa [#allocation3], 0
    %9 = vsyncpa [#allocation6], 0
    %10 = vsyncpa [#allocation4], 0
    // Predicated region
    $region2: #{tpu_custom_call.1} parent=1 // pred_check
      _
    $region3: #{tpu_custom_call.1} parent=1 // pred_check_branch
      %12 = sbr.rel (0) target = $region5
    $region4: #{tpu_custom_call.1} parent=1 // pred_region
      %14 = vsyncadd [#allocation3], 0
      %s15 = sshll.u32 %s0, 4
      %s16 = int_to_ptr.hbm [resolvable:$true] %s15
      %s17 = sshll.u32 [#allocation2], 4
      %s18 = int_to_ptr.vmem [resolvable:$true] %s17
      %23 = dma.hbm_to_vmem [thread:$0]  %s16, 256, %s18, [#allocation3], 128, 128, 8
    $region5: #{tpu_custom_call.1} parent=1 // pred_fallthru
      _
    // Predicated region
    $region6: #{tpu_custom_call.1} parent=1 // pred_check
      _
    $region7: #{tpu_custom_call.1} parent=1 // pred_check_branch
      %25 = sbr.rel (0) target = $region9
    $region8: #{tpu_custom_call.1} parent=1 // pred_region
      %27 = vsyncadd [#allocation6], 0
      %s29 = sshll.u32 %s1, 4
      %s30 = int_to_ptr.hbm [resolvable:$true] %s29
      %s31 = sshll.u32 [#allocation5], 4
      %s32 = int_to_ptr.vmem [resolvable:$true] %s31
      %34 = dma.hbm_to_vmem [thread:$0]  %s30, 16, %s32, [#allocation6]
    $region9: #{tpu_custom_call.1} parent=1 // pred_fallthru
      _
    // Predicated region
    $region10: #{tpu_custom_call.1} parent=1 // pred_check
      _
    $region11: #{tpu_custom_call.1} parent=1 // pred_check_branch
      %36 = sbr.rel (0) target = $region13
    $region12: #{tpu_custom_call.1} parent=1 // pred_region
      _
    $region13: #{tpu_custom_call.1} parent=1 // pred_fallthru
      _
    // Predicated region
    $region14: #{tpu_custom_call.1} parent=1 // pred_check
      _
    $region15: #{tpu_custom_call.1} parent=1 // pred_check_branch
      %38 = sbr.rel (0) target = $region17
    $region16: #{tpu_custom_call.1} parent=1 // pred_region
      %40 = dma.done [#allocation3], 256
    $region17: #{tpu_custom_call.1} parent=1 // pred_fallthru
      _
    // Predicated region
    $region18: #{tpu_custom_call.1} parent=1 // pred_check
      _
    $region19: #{tpu_custom_call.1} parent=1 // pred_check_branch
      %42 = sbr.rel (0) target = $region21
    $region20: #{tpu_custom_call.1} parent=1 // pred_region
      %44 = dma.done [#allocation6], 16
    $region21: #{tpu_custom_call.1} parent=1 // pred_fallthru
      _
    %v45 = vld [vmem:[#allocation2] sm:$0xff]
    %v46 = vld [vmem:[#allocation2 + $0x8] sm:$0xff]
    %vm47 = vcmask 261120
    %v48 = vsel %vm47, %v45, 0.0
    %49 = vadd.xlane.f32.xlu0 %v48
    %v50 = vpop.xlane.xlu0 %49
    %v51 = vsel %vm47, %v46, 0.0
    %52 = vadd.xlane.f32.xlu0 %v51
    %v53 = vpop.xlane.xlu0 %52
    %v54 = vrcp.pop 32.0
    %v55 = vmul.f32 32.0, %v54
    %v56 = vsub.f32 1.0, %v55
    %v57 = vmul.f32 %v54, %v56
    %v58 = vadd.f32 %v54, %v57
    %vm59 = vweird.f32 %v54
    %v60 = vsel %vm59, %v54, %v58
    %v61 = vmul.f32 %v50, %v60
    %v62 = vmul.f32 %v53, %v60
    %v63 = vsub.f32 %v45, %v61
    %v64 = vsub.f32 %v46, %v62
    %v65 = vmul.f32 %v63, %v63
    %v66 = vmul.f32 %v64, %v64
    %v67 = vsel %vm47, %v65, 0.0
    %68 = vadd.xlane.f32.xlu0 %v67
    %v69 = vpop.xlane.xlu0 %68
    %v70 = vsel %vm47, %v66, 0.0
    %71 = vadd.xlane.f32.xlu0 %v70
    %v72 = vpop.xlane.xlu0 %71
    %v73 = vrcp.pop 31.0
    %v74 = vmul.f32 31.0, %v73
    %v75 = vsub.f32 1.0, %v74
    %v76 = vmul.f32 %v73, %v75
    %v77 = vadd.f32 %v73, %v76
    %vm78 = vweird.f32 %v73
    %v79 = vsel %vm78, %v73, %v77
    %v80 = vmul.f32 %v69, %v79
    %v81 = vmul.f32 %v72, %v79
    %v82 = vrsqrt.pop %v80
    %v83 = vmul.f32 %v82, %v80
    %v84 = vmul.f32 %v83, %v82
    %v85 = vmul.f32 0.5, %v84
    %v86 = vsub.f32 1.5, %v85
    %v87 = vmul.f32 %v82, %v86
    %v88 = vmul.f32 %v80, %v87
    %vm89 = vcmp.eq.f32.partialorder %v80, inf
    %v90 = vsel %vm89, %v80, %v88
    %vm91 = vcmp.eq.f32.partialorder %v80, 0.0
    %v92 = vand.u32 %v80, 2147483648
    %v93 = vsel %vm91, %v92, %v90
    %v94 = vrsqrt.pop %v81
    %v95 = vmul.f32 %v94, %v81
    %v96 = vmul.f32 %v95, %v94
    %v97 = vmul.f32 0.5, %v96
    %v98 = vsub.f32 1.5, %v97
    %v99 = vmul.f32 %v94, %v98
    %v100 = vmul.f32 %v81, %v99
    %vm101 = vcmp.eq.f32.partialorder %v81, inf
    %v102 = vsel %vm101, %v81, %v100
    %vm103 = vcmp.eq.f32.partialorder %v81, 0.0
    %v104 = vand.u32 %v81, 2147483648
    %v105 = vsel %vm103, %v104, %v102
    %v106 = vadd.f32 %v93, 1e-12
    %v107 = vadd.f32 %v105, 1e-12
    %v108 = vrcp.pop %v106
    %v109 = vmul.f32 %v106, %v108
    %v110 = vsub.f32 1.0, %v109
    %v111 = vmul.f32 %v108, %v110
    %v112 = vadd.f32 %v108, %v111
    %vm113 = vweird.f32 %v106
    %vm114 = vweird.f32 %v108
    %vm115 = vmor %vm113, %vm114
    %v116 = vsel %vm115, %v108, %v112
    %v117 = vand.u32 2147483647, %v106
    %vm118 = vcmp.eq.f32.partialorder %v117, 8.507059e+37
    %v119 = vand.u32 %v106, 2147483648
    %v120 = vor.u32 1.1754944e-38, %v119
    %v121 = vsel %vm118, %v120, %v116
    %v122 = vmul.f32 1.0, %v121
    %v123 = vrcp.pop %v107
    %v124 = vmul.f32 %v107, %v123
    %v125 = vsub.f32 1.0, %v124
    %v126 = vmul.f32 %v123, %v125
    %v127 = vadd.f32 %v123, %v126
    %vm128 = vweird.f32 %v107
    %vm129 = vweird.f32 %v123
    %vm130 = vmor %vm128, %vm129
    %v131 = vsel %vm130, %v123, %v127
    %v132 = vand.u32 2147483647, %v107
    %vm133 = vcmp.eq.f32.partialorder %v132, 8.507059e+37
    %v134 = vand.u32 %v107, 2147483648
    %v135 = vor.u32 1.1754944e-38, %v134
    %v136 = vsel %vm133, %v135, %v131
    %v137 = vmul.f32 1.0, %v136
    %v138 = vld [vmem:[#allocation5] sm:$0x1]
    %v139 = vld [vmem:[%s2] sm:$0x1]
    %v140 = vmul.f32 %v63, %v122
    %v141 = vmul.f32 %v64, %v137
    %v143 = vperm.slane %v138, 0
    %v145 = vmul.f32 %v143, %v140
    %v146 = vmul.f32 %v143, %v141
    %v148 = vperm.slane %v139, 0
    %v150 = vadd.f32 %v145, %v148
    %v151 = vadd.f32 %v146, %v148
    %152 = vst.msk [vmem:[#allocation7] sm:$0xff] %vm47, %v150
    %153 = vst.msk [vmem:[#allocation7 + $0x8] sm:$0xff] %vm47, %v151
    // Predicated region
    $region22: #{tpu_custom_call.1} parent=1 // pred_check
      _
    $region23: #{tpu_custom_call.1} parent=1 // pred_check_branch
      %155 = sbr.rel (0) target = $region25
    $region24: #{tpu_custom_call.1} parent=1 // pred_region
      %157 = vsyncadd [#allocation4], 0
      %s158 = sshll.u32 [#allocation7], 4
      %s159 = int_to_ptr.vmem [resolvable:$true] %s158
      %s160 = sshll.u32 %s3, 4
      %s161 = int_to_ptr.hbm [resolvable:$true] %s160
      %166 = dma.vmem_to_hbm [thread:$0]  %s159, 256, %s161, [#allocation4], 128, 128, 8
    $region25: #{tpu_custom_call.1} parent=1 // pred_fallthru
      _
    // Predicated region
    $region26: #{tpu_custom_call.1} parent=1 // pred_check
      _
    $region27: #{tpu_custom_call.1} parent=1 // pred_check_branch
      %168 = sbr.rel (0) target = $region29
    $region28: #{tpu_custom_call.1} parent=1 // pred_region
      %170 = dma.done [#allocation4], 256
    $region29: #{tpu_custom_call.1} parent=1 // pred_fallthru
      _
    %171 = vsyncpa [#allocation3], 1
    %172 = vsyncpa [#allocation6], 1
    %173 = vsyncpa [#allocation4], 1

</llo_original>
